<compile_context>
chip_gen: v7x
topology: tpu7x:2x2x1
jax: 0.10.0
libtpu: 0.0.40
codegen_flags: <defaults>
</compile_context>

<pallas_src>
import jax
import jax.numpy as jnp
from jax.experimental import pallas as pl
from jax.experimental.pallas import tpu as pltpu


# ---------------------------------------------------------------------------
# Kernels
# ---------------------------------------------------------------------------
def _swiglu_kernel_fullk(x_ref, w_ref, b_ref, o_ref):
    # x_ref: (TM, K)      activations tile
    # w_ref: (K, 2*TN)    packed weight tile: [:, :TN] = gate, [:, TN:] = silu
    # b_ref: (1, 2*TN)    packed bias tile
    # o_ref: (TM, TN)     output tile
    tn = o_ref.shape[-1]
    h = jnp.dot(x_ref[...], w_ref[...], preferred_element_type=jnp.float32)
    h = h + b_ref[...].astype(jnp.float32)
    h1 = h[:, :tn]
    h2 = h[:, tn:]
    # silu(h2) = h2 * sigmoid(h2); sigmoid lowers to the EUP slot.
    o_ref[...] = (h1 * (h2 * jax.nn.sigmoid(h2))).astype(o_ref.dtype)


def _swiglu_kernel_blockk(x_ref, w_ref, b_ref, o_ref, acc_ref):
    # Blocked-K fallback: single fused (TM, 2*TN) f32 accumulator.
    k = pl.program_id(2)

    @pl.when(k == 0)
    def _init():
        acc_ref[...] = jnp.zeros_like(acc_ref)

    acc_ref[...] += jnp.dot(x_ref[...], w_ref[...],
                            preferred_element_type=jnp.float32)

    @pl.when(k == pl.num_programs(2) - 1)
    def _finalize():
        tn = o_ref.shape[-1]
        h = acc_ref[...] + b_ref[...].astype(jnp.float32)
        h1 = h[:, :tn]
        h2 = h[:, tn:]
        o_ref[...] = (h1 * (h2 * jax.nn.sigmoid(h2))).astype(o_ref.dtype)


# ---------------------------------------------------------------------------
# Wrapper helpers
# ---------------------------------------------------------------------------
def _round_up(x, m):
    return ((x + m - 1) // m) * m


def _pad2d(a, rows, cols):
    pr, pc = rows - a.shape[0], cols - a.shape[1]
    if pr == 0 and pc == 0:
        return a
    return jnp.pad(a, ((0, pr), (0, pc)))


def _pad1d(a, n):
    if a.shape[0] == n:
        return a
    return jnp.pad(a, (0, n - a.shape[0]))


def _largest_divisor_tile(extent, cap, step=128):
    """Largest multiple of `step` that divides `extent` and is <= cap."""
    cap = min(cap, extent)
    cap = (cap // step) * step
    for cand in range(cap, step - 1, -step):
        if extent % cand == 0:
            return cand
    return step


def _vmem_bytes(tm, tn, tk, itemsize, out_itemsize, multi_k):
    """Rough VMEM footprint with default double-buffering."""
    two_tn = 2 * tn
    total = 2 * tm * tk * itemsize            # x (double-buffered)
    total += 2 * tk * two_tn * itemsize       # packed weight
    total += 2 * two_tn * itemsize            # packed bias
    total += 2 * tm * tn * out_itemsize       # output
    total += tm * two_tn * 4                  # f32 pre-activation intermediate
    if multi_k:
        total += tm * two_tn * 4              # f32 accumulator scratch
    return total


def _choose_config(m, dim, itemsize, out_itemsize, budget):
    k_pad = _round_up(dim, 128)
    n_pad = _round_up(dim, 128)
    gran = {4: 8, 2: 16, 1: 32}.get(itemsize, 8)   # sublane packing per dtype
    m_full = _round_up(m, gran)

    # Column-tile candidates (multiples of 128 dividing n_pad, biggest first).
    tn_cap = 512
    if m_full <= 1024 and n_pad >= 256:
        # Decode-like shapes end up with a single row tile; keep >= 2 column
        # tiles so both v7x TensorCores get work.
        tn_cap = min(tn_cap, max(128, n_pad // 2))
    tn_cands = [c for c in range(min(tn_cap, n_pad) // 128 * 128, 127, -128)
                if n_pad % c == 0]
    if not tn_cands:
        tn_cands = [128]

    def pick_tm(tn, tk, multi_k, floor):
        def fits(t):
            return _vmem_bytes(t, tn, tk, itemsize, out_itemsize,
                               multi_k) <= budget
        if m_full <= 1024 and fits(m_full):
            return m_full                       # single row tile, minimal pad
        lo = max(gran, floor)
        for cand in (1024, 512, 256, 128, 64, 32, 16, 8):
            if cand < lo or not fits(cand):
                continue
            overshoot = _round_up(m, cand) - m
            if overshoot * 8 <= m or cand <= lo:  # <= 12.5% padded-row waste
                return cand
        return None

    # Preferred: full-K contraction (weights VMEM-resident, no accumulator).
    for floor in (min(128, m_full), gran):
        for tn in tn_cands:
            tm = pick_tm(tn, k_pad, False, floor)
            if tm is not None:
                return dict(tm=tm, tn=tn, tk=k_pad,
                            n_pad=n_pad, k_pad=k_pad, multi_k=False)

    # Fallback: blocked K with a single fused f32 accumulator.
    for tn in tn_cands:
        for tk_cap in (2048, 1024, 512, 256, 128):
            tk = _largest_divisor_tile(k_pad, tk_cap)
            tm = pick_tm(tn, tk, True, gran)
            if tm is not None:
                return dict(tm=tm, tn=tn, tk=tk,
                            n_pad=n_pad, k_pad=k_pad, multi_k=True)

    # Last resort: smallest legal tiles.
    return dict(tm=gran, tn=128, tk=128, n_pad=n_pad, k_pad=k_pad,
                multi_k=k_pad > 128)


# ---------------------------------------------------------------------------
# Wrapper
# ---------------------------------------------------------------------------
def swiglu(x, weight, bias):
    """SwiGLU forward.

    x: [..., dim]; weight: [2*dim, dim] (PyTorch nn.Linear layout);
    bias: [2*dim].  Returns [..., dim].
    """
    dim = x.shape[-1]
    lead = x.shape[:-1]
    x2d = x.reshape(-1, dim)
    m = x2d.shape[0]

    weight = weight.astype(x.dtype)
    bias = bias.astype(x.dtype)

    itemsize = jnp.dtype(x.dtype).itemsize
    out_itemsize = itemsize

    # Generation-aware VMEM budget (128 MiB v5e/v6e, 64 MiB/TC v7x).
    try:
        info = pltpu.get_tpu_info()
        vmem_cap = int(getattr(info, "vmem_capacity_bytes", 64 << 20))
    except Exception:
        vmem_cap = 64 << 20
    budget = int(vmem_cap * 0.6)

    cfg = _choose_config(m, dim, itemsize, out_itemsize, budget)
    tm, tn, tk = cfg["tm"], cfg["tn"], cfg["tk"]
    n_pad, k_pad = cfg["n_pad"], cfg["k_pad"]
    multi_k = cfg["multi_k"]

    m_pad = _round_up(m, tm)
    jt = n_pad // tn
    it = m_pad // tm
    kt = k_pad // tk

    # ---- one-time weight/bias packing -------------------------------------
    # Transpose to [K, N] (no in-kernel relayout) and interleave the gate and
    # silu column halves per output tile so one dot yields both halves.
    w1 = _pad2d(weight[:dim], n_pad, k_pad).T      # [k_pad, n_pad]  gate half
    w2 = _pad2d(weight[dim:], n_pad, k_pad).T      # [k_pad, n_pad]  silu half
    w_packed = jnp.concatenate(
        [w1.reshape(k_pad, jt, tn), w2.reshape(k_pad, jt, tn)], axis=2
    ).reshape(k_pad, 2 * n_pad)
    b1 = _pad1d(bias[:dim], n_pad)
    b2 = _pad1d(bias[dim:], n_pad)
    b_packed = jnp.concatenate(
        [b1.reshape(jt, tn), b2.reshape(jt, tn)], axis=1
    ).reshape(1, 2 * n_pad)

    x_p = _pad2d(x2d, m_pad, k_pad)

    cost = pl.CostEstimate(
        flops=2 * m_pad * k_pad * 2 * n_pad,
        transcendentals=2 * m_pad * n_pad,          # sigmoid = exp + recip
        bytes_accessed=(x_p.size * jt
                        + w_packed.size * (it if multi_k else 1)
                        + b_packed.size
                        + m_pad * n_pad) * itemsize,
    )

    compiler_params = pltpu.CompilerParams(
        dimension_semantics=(("parallel", "parallel", "arbitrary")
                             if multi_k else ("parallel", "parallel")),
        vmem_limit_bytes=int(vmem_cap * 0.85),
    )

    if not multi_k:
        # Grid (j, i): weight tile index depends only on j (outer axis), so it
        # stays VMEM-resident across the whole row sweep.
        out_p = pl.pallas_call(
            _swiglu_kernel_fullk,
            out_shape=jax.ShapeDtypeStruct((m_pad, n_pad), x.dtype),
            grid_spec=pltpu.PrefetchScalarGridSpec(
                num_scalar_prefetch=0,
                grid=(jt, it),
                in_specs=[
                    pl.BlockSpec((tm, k_pad), lambda j, i: (i, 0)),       # x
                    pl.BlockSpec((k_pad, 2 * tn), lambda j, i: (0, j)),   # W
                    pl.BlockSpec((1, 2 * tn), lambda j, i: (0, j)),       # b
                ],
                out_specs=pl.BlockSpec((tm, tn), lambda j, i: (i, j)),
            ),
            compiler_params=compiler_params,
            cost_estimate=cost,
        )(x_p, w_packed, b_packed)
    else:
        out_p = pl.pallas_call(
            _swiglu_kernel_blockk,
            out_shape=jax.ShapeDtypeStruct((m_pad, n_pad), x.dtype),
            grid_spec=pltpu.PrefetchScalarGridSpec(
                num_scalar_prefetch=0,
                grid=(jt, it, kt),
                in_specs=[
                    pl.BlockSpec((tm, tk), lambda j, i, k: (i, k)),       # x
                    pl.BlockSpec((tk, 2 * tn), lambda j, i, k: (k, j)),   # W
                    pl.BlockSpec((1, 2 * tn), lambda j, i, k: (0, j)),    # b
                ],
                out_specs=pl.BlockSpec((tm, tn), lambda j, i, k: (i, j)),
                scratch_shapes=[pltpu.VMEM((tm, 2 * tn), jnp.float32)],
            ),
            compiler_params=compiler_params,
            cost_estimate=cost,
        )(x_p, w_packed, b_packed)

    return out_p[:m, :dim].reshape(*lead, dim)


# ---------------------------------------------------------------------------
# Pure-JAX reference
# ---------------------------------------------------------------------------
def swiglu_ref(x, weight, bias):
    h = x @ weight.T + bias
    x1, x2 = jnp.split(h, 2, axis=-1)
    return x1 * (x2 * jax.nn.sigmoid(x2))


if __name__ == "__main__":
    key = jax.random.PRNGKey(0)
    kx, kw, kb = jax.random.split(key, 3)

    # Small demo shape consistent with the module: batch=2, seq=8, dim=32.
    batch, seq, dim = 2, 8, 32
    x = jax.random.normal(kx, (batch, seq, dim), dtype=jnp.float32)
    weight = jax.random.normal(kw, (2 * dim, dim), dtype=jnp.float32) / dim ** 0.5
    bias = jax.random.normal(kb, (2 * dim,), dtype=jnp.float32) * 0.01

    out = jax.block_until_ready(swiglu(x, weight, bias))
    ref = swiglu_ref(x, weight, bias)
    assert out.shape == (batch, seq, dim)
    assert jnp.allclose(out, ref, atol=1e-4, rtol=1e-4), "mismatch vs reference (small)"

    # Ragged shape exercising multi-column-tile path and zero-padding in M/N/K.
    batch2, seq2, dim2 = 2, 150, 200
    k2x, k2w, k2b = jax.random.split(jax.random.PRNGKey(0), 3)
    x2 = jax.random.normal(k2x, (batch2, seq2, dim2), dtype=jnp.float32)
    w2 = jax.random.normal(k2w, (2 * dim2, dim2), dtype=jnp.float32) / dim2 ** 0.5
    b2 = jax.random.normal(k2b, (2 * dim2,), dtype=jnp.float32) * 0.01
    out2 = jax.block_until_ready(swiglu(x2, w2, b2))
    ref2 = swiglu_ref(x2, w2, b2)
    assert out2.shape == (batch2, seq2, dim2)
    assert jnp.allclose(out2, ref2, atol=1e-3, rtol=1e-3), "mismatch vs reference (ragged)"

    print("KERNEL_OK")
</pallas_src>

<mosaic_0001>
module attributes {stable_mosaic.version = 11 : i64} {
  func.func @_swiglu_kernel_fullk(%arg0: i32, %arg1: i32, %arg2: memref<16x128xf32, #tpu.memory_space<vmem>>, %arg3: memref<128x256xf32, #tpu.memory_space<vmem>>, %arg4: memref<1x256xf32, #tpu.memory_space<vmem>>, %arg5: memref<16x128xf32, #tpu.memory_space<vmem>>) attributes {dimension_semantics = [#tpu.dimension_semantics<parallel>, #tpu.dimension_semantics<parallel>], iteration_bounds = array<i64: 1, 1>, scalar_prefetch = 0 : i64, scratch_operands = 0 : i64, tpu.core_type = #tpu.core_type<tc>, window_params = [{transform_indices = @transform_0, window_bounds = array<i64: 16, 128>}, {transform_indices = @transform_1, window_bounds = array<i64: 128, 256>}, {transform_indices = @transform_2, window_bounds = array<i64: 1, 256>}, {transform_indices = @transform_3, window_bounds = array<i64: 16, 128>}]} {
    %c0 = arith.constant 0 : index
    %c0_0 = arith.constant 0 : index
    %0 = vector.load %arg2[%c0, %c0_0] : memref<16x128xf32, #tpu.memory_space<vmem>>, vector<16x128xf32>
    %c0_1 = arith.constant 0 : index
    %c0_2 = arith.constant 0 : index
    %1 = vector.load %arg3[%c0_1, %c0_2] : memref<128x256xf32, #tpu.memory_space<vmem>>, vector<128x256xf32>
    %cst = arith.constant dense<0.000000e+00> : vector<16x256xf32>
    %2 = tpu.matmul %0, %1, %cst {dimension_numbers = #tpu.dot_dimension_numbers<[1], [0], [0], [1], [0, 0, 1, 1], [], []>} : vector<16x128xf32>, vector<128x256xf32>, vector<16x256xf32> -> vector<16x256xf32>
    %c0_3 = arith.constant 0 : index
    %c0_4 = arith.constant 0 : index
    %3 = vector.load %arg4[%c0_3, %c0_4] : memref<1x256xf32, #tpu.memory_space<vmem>>, vector<1x256xf32>
    %4 = vector.broadcast %3 : vector<1x256xf32> to vector<16x256xf32>
    %5 = arith.addf %2, %4 : vector<16x256xf32>
    %6 = vector.extract_strided_slice %5 {offsets = [0, 0], sizes = [16, 128], strides = [1, 1]} : vector<16x256xf32> to vector<16x128xf32>
    %7 = vector.extract_strided_slice %5 {offsets = [0, 128], sizes = [16, 128], strides = [1, 1]} : vector<16x256xf32> to vector<16x128xf32>
    %8 = arith.negf %7 : vector<16x128xf32>
    %9 = math.exp %8 : vector<16x128xf32>
    %cst_5 = arith.constant 1.000000e+00 : f32
    %10 = vector.broadcast %cst_5 : f32 to vector<16x128xf32>
    %11 = arith.addf %10, %9 : vector<16x128xf32>
    %12 = arith.divf %10, %11 : vector<16x128xf32>
    %13 = arith.mulf %7, %12 : vector<16x128xf32>
    %14 = arith.mulf %6, %13 : vector<16x128xf32>
    %c0_6 = arith.constant 0 : index
    %c0_7 = arith.constant 0 : index
    %15 = vector.load %arg5[%c0_6, %c0_7] : memref<16x128xf32, #tpu.memory_space<vmem>>, vector<16x128xf32>
    tpu.vector_store %arg5[%c0_6, %c0_7], %14 {strides = array<i32>} : memref<16x128xf32, #tpu.memory_space<vmem>>, vector<16x128xf32>,
    return
  }
  func.func @transform_0(%arg0: i32, %arg1: i32) -> (i32, i32) {
    %c0_i32 = arith.constant 0 : i32
    %c0_i32_0 = arith.constant 0 : i32
    return %arg1, %c0_i32 : i32, i32
  }
  func.func @transform_1(%arg0: i32, %arg1: i32) -> (i32, i32) {
    %c0_i32 = arith.constant 0 : i32
    %c0_i32_0 = arith.constant 0 : i32
    return %c0_i32, %arg0 : i32, i32
  }
  func.func @transform_2(%arg0: i32, %arg1: i32) -> (i32, i32) {
    %c0_i32 = arith.constant 0 : i32
    %c0_i32_0 = arith.constant 0 : i32
    return %c0_i32, %arg0 : i32, i32
  }
  func.func @transform_3(%arg0: i32, %arg1: i32) -> (i32, i32) {
    %c0_i32 = arith.constant 0 : i32
    return %arg1, %arg0 : i32, i32
  }
}

</mosaic_0001>

<llo_original>
// kernel: tpu_custom_call.1
$region0: #{tpu_custom_call.1}
  #allocation0 [shape = 'u32[]', space=smem, size = 0x4, offset = 0x4, fixed_abs, tag = 'smem constant byte address 0x4 - core index']
  #allocation1 [shape = 'u32[144,128]{1,0:T(1,128)}', space=vmem, size = 0x12000, scoped, tag = 'internal scratch']
  %s0 = inlined_call_operand.hbm [shape: f32[16,128], index: 0, kind: input, shape index: {}]
  %s1 = inlined_call_operand.hbm [shape: f32[128,256], index: 1, kind: input, shape index: {}]
  %s2 = inlined_call_operand.vmem [shape: f32[1,256], index: 2, kind: input, shape index: {}]
  %s3 = inlined_call_operand.hbm [shape: f32[16,128], index: 3, kind: output, shape index: {}]
  %s4 = sld [smem:[#allocation0]]
  $region30: #{tpu_custom_call.1} parent=0
    _
  %s6 = ssub.s32 1, %s4
  %s7 = scalar_select 0, %s6, %s4
  $region1: #{tpu_custom_call.1} parent=0
    #allocation2 [shape = 'u8[8192]{0}', space=vmem, size = 0x2000, scoped, tag = 'input window, operand 0, single buffered']
    #allocation3 [shape = 's32[1]{0}', space=sflag, size = 0x4, scoped, tag = 'scoped memory for tpu_custom_call.1']
    #allocation4 [shape = 's32[1]{0}', space=sflag, size = 0x4, scoped, tag = 'scoped memory for tpu_custom_call.1']
    #allocation5 [shape = 'u8[131072]{0}', space=vmem, size = 0x20000, scoped, tag = 'input window, operand 1, single buffered']
    #allocation6 [shape = 's32[1]{0}', space=sflag, size = 0x4, scoped, tag = 'scoped memory for tpu_custom_call.1']
    #allocation7 [shape = 'u8[8192]{0}', space=vmem, size = 0x2000, scoped, tag = 'output window, operand 0, single buffered']
    %8 = vsyncpa [#allocation3], 0
    %9 = vsyncpa [#allocation6], 0
    %10 = vsyncpa [#allocation4], 0
    // Predicated region
    $region2: #{tpu_custom_call.1} parent=1 // pred_check
      _
    $region3: #{tpu_custom_call.1} parent=1 // pred_check_branch
      %12 = sbr.rel (0) target = $region5
    $region4: #{tpu_custom_call.1} parent=1 // pred_region
      %s14 = ssub.s32 256, 256
      %15 = vsyncadd [#allocation3], %s14
      %s16 = sshll.u32 [#allocation2], 4
      %s17 = int_to_ptr.vmem [resolvable:$true] %s16
      %22 = dma.hbm_to_vmem [thread:$0]  %s0, 256, %s17, [#allocation3], 128, 128, 8
    $region5: #{tpu_custom_call.1} parent=1 // pred_fallthru
      _
    // Predicated region
    $region6: #{tpu_custom_call.1} parent=1 // pred_check
      _
    $region7: #{tpu_custom_call.1} parent=1 // pred_check_branch
      %24 = sbr.rel (0) target = $region9
    $region8: #{tpu_custom_call.1} parent=1 // pred_region
      %s26 = ssub.s32 4096, 4096
      %27 = vsyncadd [#allocation6], %s26
      %s28 = sshll.u32 [#allocation5], 4
      %s29 = int_to_ptr.vmem [resolvable:$true] %s28
      %34 = dma.hbm_to_vmem [thread:$0]  %s1, 4096, %s29, [#allocation6], 256, 256, 16
    $region9: #{tpu_custom_call.1} parent=1 // pred_fallthru
      _
    // Predicated region
    $region10: #{tpu_custom_call.1} parent=1 // pred_check
      _
    $region11: #{tpu_custom_call.1} parent=1 // pred_check_branch
      %36 = sbr.rel (0) target = $region13
    $region12: #{tpu_custom_call.1} parent=1 // pred_region
      _
    $region13: #{tpu_custom_call.1} parent=1 // pred_fallthru
      _
    // Predicated region
    $region14: #{tpu_custom_call.1} parent=1 // pred_check
      _
    $region15: #{tpu_custom_call.1} parent=1 // pred_check_branch
      %38 = sbr.rel (0) target = $region17
    $region16: #{tpu_custom_call.1} parent=1 // pred_region
      %39 = dma.done [#allocation3], 256
    $region17: #{tpu_custom_call.1} parent=1 // pred_fallthru
      _
    // Predicated region
    $region18: #{tpu_custom_call.1} parent=1 // pred_check
      _
    $region19: #{tpu_custom_call.1} parent=1 // pred_check_branch
      %41 = sbr.rel (0) target = $region21
    $region20: #{tpu_custom_call.1} parent=1 // pred_region
      %42 = dma.done [#allocation6], 4096
    $region21: #{tpu_custom_call.1} parent=1 // pred_fallthru
      _
    %v43 = vld [vmem:[#allocation2] sm:$0xff]
    %v44 = vld [vmem:[#allocation2 + $0x8] sm:$0xff]
    %v45 = vld [vmem:[#allocation5] sm:$0xff]
    %v46 = vld [vmem:[#allocation5 + $0x8] sm:$0xff]
    %v47 = vld [vmem:[#allocation5 + $0x10] sm:$0xff]
    %v48 = vld [vmem:[#allocation5 + $0x18] sm:$0xff]
    %v49 = vld [vmem:[#allocation5 + $0x20] sm:$0xff]
    %v50 = vld [vmem:[#allocation5 + $0x28] sm:$0xff]
    %v51 = vld [vmem:[#allocation5 + $0x30] sm:$0xff]
    %v52 = vld [vmem:[#allocation5 + $0x38] sm:$0xff]
    %v53 = vld [vmem:[#allocation5 + $0x40] sm:$0xff]
    %v54 = vld [vmem:[#allocation5 + $0x48] sm:$0xff]
    %v55 = vld [vmem:[#allocation5 + $0x50] sm:$0xff]
    %v56 = vld [vmem:[#allocation5 + $0x58] sm:$0xff]
    %v57 = vld [vmem:[#allocation5 + $0x60] sm:$0xff]
    %v58 = vld [vmem:[#allocation5 + $0x68] sm:$0xff]
    %v59 = vld [vmem:[#allocation5 + $0x70] sm:$0xff]
    %v60 = vld [vmem:[#allocation5 + $0x78] sm:$0xff]
    %v61 = vld [vmem:[#allocation5 + $0x80] sm:$0xff]
    %v62 = vld [vmem:[#allocation5 + $0x88] sm:$0xff]
    %v63 = vld [vmem:[#allocation5 + $0x90] sm:$0xff]
    %v64 = vld [vmem:[#allocation5 + $0x98] sm:$0xff]
    %v65 = vld [vmem:[#allocation5 + $0xa0] sm:$0xff]
    %v66 = vld [vmem:[#allocation5 + $0xa8] sm:$0xff]
    %v67 = vld [vmem:[#allocation5 + $0xb0] sm:$0xff]
    %v68 = vld [vmem:[#allocation5 + $0xb8] sm:$0xff]
    %v69 = vld [vmem:[#allocation5 + $0xc0] sm:$0xff]
    %v70 = vld [vmem:[#allocation5 + $0xc8] sm:$0xff]
    %v71 = vld [vmem:[#allocation5 + $0xd0] sm:$0xff]
    %v72 = vld [vmem:[#allocation5 + $0xd8] sm:$0xff]
    %v73 = vld [vmem:[#allocation5 + $0xe0] sm:$0xff]
    %v74 = vld [vmem:[#allocation5 + $0xe8] sm:$0xff]
    %v75 = vld [vmem:[#allocation5 + $0xf0] sm:$0xff]
    %v76 = vld [vmem:[#allocation5 + $0xf8] sm:$0xff]
    %v77 = vld [vmem:[%s2] sm:$0x3]
    %v79 = vlaneseq
    %v80 = vshrl.u32 %v79, 7
    %v81 = vsub.s32 0, %v80
    %v82 = vrot.slane %v77, %v81
    %v83 = vlaneseq
    %v84 = vshrl.u32 %v83, 7
    %v85 = vsub.s32 1, %v84
    %v86 = vrot.slane %v77, %v85
    %89 = vmatprep.subr.mxu0 %v46
    %90 = vmatpush1.msra.mxu0 %v45
    %91 = vmatprep.subr.mxu0 %v48
    %92 = vmatpush1.msra.mxu0 %v47
    %93 = vmatprep.subr.mxu0 %v50
    %94 = vmatpush1.msra.mxu0 %v49
    %95 = vmatprep.subr.mxu0 %v52
    %96 = vmatpush1.msra.mxu0 %v51
    %97 = vmatprep.subr.mxu0 %v54
    %98 = vmatpush1.msra.mxu0 %v53
    %99 = vmatprep.subr.mxu0 %v56
    %100 = vmatpush1.msra.mxu0 %v55
    %101 = vmatprep.subr.mxu0 %v58
    %102 = vmatpush1.msra.mxu0 %v57
    %103 = vmatprep.subr.mxu0 %v60
    %104 = vmatpush1.msra.mxu0 %v59
    %105 = vmatprep.subr.mxu0 %v62
    %106 = vmatpush1.msra.mxu0 %v61
    %107 = vmatprep.subr.mxu0 %v64
    %108 = vmatpush1.msra.mxu0 %v63
    %109 = vmatprep.subr.mxu0 %v66
    %110 = vmatpush1.msra.mxu0 %v65
    %111 = vmatprep.subr.mxu0 %v68
    %112 = vmatpush1.msra.mxu0 %v67
    %113 = vmatprep.subr.mxu0 %v70
    %114 = vmatpush1.msra.mxu0 %v69
    %115 = vmatprep.subr.mxu0 %v72
    %116 = vmatpush1.msra.mxu0 %v71
    %117 = vmatprep.subr.mxu0 %v74
    %118 = vmatpush1.msra.mxu0 %v73
    %119 = vmatprep.subr.mxu0 %v76
    %120 = vmatpush1.msra.mxu0 %v75
    %121 = vmatprep.subr.mxu0 0.0
    %122 = vmatpush1.msra.mxu0 0.0
    %123 = vmatprep.subr.mxu0 0.0
    %124 = vmatpush1.msra.mxu0 0.0
    %125 = vmatprep.subr.mxu0 0.0
    %126 = vmatpush1.msra.mxu0 0.0
    %127 = vmatprep.subr.mxu0 0.0
    %128 = vmatpush1.msra.mxu0 0.0
    %129 = vmatprep.subr.mxu0 0.0
    %130 = vmatpush1.msra.mxu0 0.0
    %131 = vmatprep.subr.mxu0 0.0
    %132 = vmatpush1.msra.mxu0 0.0
    %133 = vmatprep.subr.mxu0 0.0
    %134 = vmatpush1.msra.mxu0 0.0
    %135 = vmatprep.subr.mxu0 0.0
    %136 = vmatpush1.msra.mxu0 0.0
    %137 = vmatprep.subr.mxu0 0.0
    %138 = vmatpush1.msra.mxu0 0.0
    %139 = vmatprep.subr.mxu0 0.0
    %140 = vmatpush1.msra.mxu0 0.0
    %141 = vmatprep.subr.mxu0 0.0
    %142 = vmatpush1.msra.mxu0 0.0
    %143 = vmatprep.subr.mxu0 0.0
    %144 = vmatpush1.msra.mxu0 0.0
    %145 = vmatprep.subr.mxu0 0.0
    %146 = vmatpush1.msra.mxu0 0.0
    %147 = vmatprep.subr.mxu0 0.0
    %148 = vmatpush1.msra.mxu0 0.0
    %149 = vmatprep.subr.mxu0 0.0
    %150 = vmatpush1.msra.mxu0 0.0
    %151 = vmatprep.subr.mxu0 0.0
    %152 = vmatpush1.msra.mxu0 0.0
    %153 = vmatprep.mubr.f32.mxu0 0.0
    %154 = vmatmul.mubr.f32.gmra.mrb[0].mxu0 %v43
    %v155 = vpop.f32.mrb[0].mxu0
    %v156 = vadd.f32 %v82, %v155
    %v157 = vpop.f32.mrb[0].mxu0
    %v158 = vadd.f32 %v86, %v157
    %159 = vmatprep.mubr.f32.mxu0 0.0
    %160 = vmatmul.mubr.f32.gmra.mrb[0].mxu0 %v44
    %v161 = vpop.f32.mrb[0].mxu0
    %v162 = vadd.f32 %v82, %v161
    %v163 = vpop.f32.mrb[0].mxu0
    %v164 = vadd.f32 %v86, %v163
    %165 = vdwg.mxu0
    %v166 = vxor.u32 %v158, 2147483648
    %v167 = vxor.u32 %v164, 2147483648
    %v168 = vmul.f32 %v166, 1.442695
    %v169 = vpow.pop %v168
    %v170 = vmul.f32 %v167, 1.442695
    %v171 = vpow.pop %v170
    %v172 = vadd.f32 %v169, 1.0
    %v173 = vadd.f32 %v171, 1.0
    %v174 = vrcp.pop %v172
    %v175 = vmul.f32 1.0, %v174
    %v176 = vrcp.pop %v173
    %v177 = vmul.f32 1.0, %v176
    %v178 = vmul.f32 %v158, %v175
    %v179 = vmul.f32 %v164, %v177
    %v180 = vmul.f32 %v156, %v178
    %v181 = vmul.f32 %v162, %v179
    %182 = vst [vmem:[#allocation7] sm:$0xff] %v180
    %183 = vst [vmem:[#allocation7 + $0x8] sm:$0xff] %v181
    // Predicated region
    $region22: #{tpu_custom_call.1} parent=1 // pred_check
      _
    $region23: #{tpu_custom_call.1} parent=1 // pred_check_branch
      %185 = sbr.rel (0) target = $region25
    $region24: #{tpu_custom_call.1} parent=1 // pred_region
      %s187 = ssub.s32 256, 256
      %188 = vsyncadd [#allocation4], %s187
      %s189 = sshll.u32 [#allocation7], 4
      %s190 = int_to_ptr.vmem [resolvable:$true] %s189
      %195 = dma.vmem_to_hbm [thread:$0]  %s190, 256, %s3, [#allocation4], 128, 128, 8
    $region25: #{tpu_custom_call.1} parent=1 // pred_fallthru
      _
    // Predicated region
    $region26: #{tpu_custom_call.1} parent=1 // pred_check
      _
    $region27: #{tpu_custom_call.1} parent=1 // pred_check_branch
      %197 = sbr.rel (0) target = $region29
    $region28: #{tpu_custom_call.1} parent=1 // pred_region
      %198 = dma.done [#allocation4], 256
    $region29: #{tpu_custom_call.1} parent=1 // pred_fallthru
      _
    %199 = vsyncpa [#allocation3], 1
    %200 = vsyncpa [#allocation6], 1
    %201 = vsyncpa [#allocation4], 1

</llo_original>
